<compile_context>
chip_gen: v7x
topology: tpu7x:2x2x1
jax: 0.10.0
libtpu: 0.0.40
codegen_flags: <defaults>
</compile_context>

<pallas_src>
import jax
import jax.numpy as jnp
import numpy as np
from jax.experimental import pallas as pl
from jax.experimental.pallas import tpu as pltpu

FC1_DIMS = 32                     # fc1_dims constructor argument (chosen small)
FC2_OUT = 64                      # fixed by nn.Linear(fc1_dims, 64)
IN_H, IN_W, IN_C = 5, 5, 8        # Linear(36,·) after Conv2d(8,4,3,'valid') => 5x5, 8-ch NHWC input
IN_FEATS = IN_H * IN_W * IN_C     # 200
CONV_OUT = 4
TILE_B = 2048                     # batch tile: multiple of 8 (sublanes) and 128 (lanes)
MIN_SPLIT_B = 1024                # below this, a single block == whole batch (no split benefit)


def _round_up(x, m):
    return -(-x // m) * m


def critic_kernel(x_ref, w1_ref, w2_ref, small_ref, q_ref):
    """Fused (conv+flatten+fc1) + ReLU + fc2 + ReLU + q head.

    x_ref:     (tile_b, 200)  raw NHWC state rows, flattened (f32 or bf16)
    w1_ref:    (200, fc1)     conv + CHW-flatten + fc1 folded into one matrix
    w2_ref:    (fc1, 64)      fc2 weight (pre-transposed)
    small_ref: (4, 128) f32   row0=b1eff, row1=b2, row2=wq, row3[0]=bq
    q_ref:     (1, tile_b)    lane-dense q output row (f32)
    """
    fc1 = w1_ref.shape[1]
    n2 = w2_ref.shape[1]

    b1 = small_ref[0:1, 0:fc1]     # (1, fc1)
    b2 = small_ref[1:2, 0:n2]      # (1, 64)
    wq = small_ref[2:3, 0:n2]      # (1, 64)
    bq = small_ref[3:4, 0:1]       # (1, 1)

    h1 = jnp.maximum(
        jnp.dot(x_ref[...], w1_ref[...], preferred_element_type=jnp.float32) + b1,
        0.0)
    h2 = jnp.maximum(
        jnp.dot(h1.astype(w2_ref.dtype), w2_ref[...],
                preferred_element_type=jnp.float32) + b2,
        0.0)
    # q head: contract the 64-dim of wq (1,64) with the 64-dim of h2 (tile_b,64)
    # -> (1, tile_b).  Output row is lane-dense (dense vst), no N=1 MXU matmul.
    q = jax.lax.dot_general(
        wq, h2, (((1,), (1,)), ((), ())),
        preferred_element_type=jnp.float32) + bq
    q_ref[...] = q.astype(q_ref.dtype)


def init_params(key, fc1_dims=FC1_DIMS):
    """Deterministic synthetic parameters with PyTorch shapes/conventions."""
    ks = jax.random.split(key, 8)

    def u(k, shape, fan_in):
        b = 1.0 / np.sqrt(fan_in)
        return jax.random.uniform(k, shape, jnp.float32, -b, b)

    return {
        "wc": u(ks[0], (CONV_OUT, IN_C, 3, 3), IN_C * 9),   # conv1.weight (O, I, kh, kw)
        "bc": u(ks[1], (CONV_OUT,), IN_C * 9),              # conv1.bias
        "w1": u(ks[2], (fc1_dims, 36), 36),                 # fc1.weight
        "b1": u(ks[3], (fc1_dims,), 36),                    # fc1.bias
        "w2": u(ks[4], (FC2_OUT, fc1_dims), fc1_dims),      # fc2.weight
        "b2": u(ks[5], (FC2_OUT,), fc1_dims),               # fc2.bias
        "wq": u(ks[6], (1, FC2_OUT), FC2_OUT),              # q.weight
        "bq": u(ks[7], (1,), FC2_OUT),                      # q.bias
    }


def preprocess_params(params, dtype=jnp.float32):
    """One-time host-side fold of conv+flatten+fc1 and packing of small vectors.

    Call once per parameter update (NOT per forward).  Fold done in float64 so
    it introduces no extra error before the final cast.  Pass
    dtype=jnp.bfloat16 to stream x / hold the two matmul weights in bf16
    (biases / q head stay f32).
    """
    wc = np.asarray(params["wc"], np.float64)          # (4, 8, 3, 3)  c,ci,kh,kw
    bc = np.asarray(params["bc"], np.float64)          # (4,)
    w1 = np.asarray(params["w1"], np.float64)          # (fc1, 36)
    b1 = np.asarray(params["b1"], np.float64)          # (fc1,)
    fc1 = w1.shape[0]
    assert fc1 <= 128, "packed-bias layout assumes fc1_dims <= 128"

    w1r = w1.reshape(fc1, CONV_OUT, 3, 3)              # (j, c, oh, ow)

    # W1eff[h, w, ci, j] = sum_{c, oh+kh=h, ow+kw=w} w1r[j,c,oh,ow] * wc[c,ci,kh,kw]
    w1eff = np.zeros((IN_H, IN_W, IN_C, fc1), np.float64)
    for oh in range(3):
        for ow in range(3):
            # contrib[kh, kw, ci, j] = sum_c wc[c, ci, kh, kw] * w1r[j, c, oh, ow]
            contrib = np.einsum("cikl,jc->klij", wc, w1r[:, :, oh, ow])
            w1eff[oh:oh + 3, ow:ow + 3] += contrib
    b1eff = b1 + np.einsum("jcab,c->j", w1r, bc)

    small = np.zeros((4, 128), np.float32)
    small[0, :fc1] = b1eff.astype(np.float32)
    small[1, :FC2_OUT] = np.asarray(params["b2"], np.float32)
    small[2, :FC2_OUT] = np.asarray(params["wq"], np.float32).reshape(FC2_OUT)
    small[3, 0] = float(np.asarray(params["bq"]).reshape(()))

    return {
        "w1eff": jnp.asarray(w1eff.reshape(IN_FEATS, fc1), dtype),
        "w2": jnp.asarray(np.asarray(params["w2"], np.float32).T, dtype),  # (fc1, 64)
        "small": jnp.asarray(small),                                       # (4, 128) f32
    }


def critic_forward(state, action, prepped, *, max_tile_b=TILE_B, min_split_b=MIN_SPLIT_B):
    del action  # unused in the reference forward(), kept for signature parity
    B = state.shape[0]
    w1eff, w2, small = prepped["w1eff"], prepped["w2"], prepped["small"]
    fc1 = w1eff.shape[1]
    stream_dtype = w1eff.dtype

    # NHWC flatten (free reshape); cast only if the producer did not already
    # hand over stream_dtype (ideally the replay buffer stores bf16 directly).
    x = state.reshape(B, IN_FEATS).astype(stream_dtype)

    if B <= min_split_b:
        # Single block equal to the full batch (block dims == full array dims,
        # so no (8,128) divisibility requirement and no padding).
        tile_b = B
        grid = 1
    else:
        # Keep >= 2 grid steps so dimension_semantics=("parallel",) can shard
        # the batch across v7x's two TensorCores; ragged last block is masked.
        tile_b = min(max_tile_b, _round_up(pl.cdiv(B, 2), 128))
        grid = pl.cdiv(B, tile_b)

    itemsize = np.dtype(stream_dtype).itemsize
    cost = pl.CostEstimate(
        flops=2 * B * (IN_FEATS * fc1 + fc1 * FC2_OUT + FC2_OUT),
        transcendentals=0,
        bytes_accessed=(B * IN_FEATS * itemsize            # x stream (dominant)
                        + B * 4                             # q output
                        + (IN_FEATS * fc1 + fc1 * FC2_OUT) * itemsize
                        + 4 * 128 * 4),
    )

    q_row = pl.pallas_call(
        critic_kernel,
        out_shape=jax.ShapeDtypeStruct((1, B), jnp.float32),
        grid=(grid,),
        in_specs=[
            pl.BlockSpec((tile_b, IN_FEATS), lambda i: (i, 0)),   # activations: tiled over batch
            pl.BlockSpec((IN_FEATS, fc1), lambda i: (0, 0)),      # folded conv+fc1 weight (resident)
            pl.BlockSpec((fc1, FC2_OUT), lambda i: (0, 0)),       # fc2 weight (resident)
            pl.BlockSpec((4, 128), lambda i: (0, 0)),             # packed b1eff/b2/wq/bq
        ],
        out_specs=pl.BlockSpec((1, tile_b), lambda i: (0, i)),    # lane-dense q row
        compiler_params=pltpu.CompilerParams(
            dimension_semantics=("parallel",)),                   # v7x: split batch across TCs
        cost_estimate=cost,
    )(x, w1eff, w2, small)

    return q_row[0, :B].reshape(B, 1)


def reference_forward(state, action, params):
    """Pure-JAX replica of the PyTorch forward (for correctness checking)."""
    del action
    x = jnp.transpose(state, (0, 3, 1, 2))              # NCHW
    conv = jax.lax.conv_general_dilated(
        x, params["wc"], (1, 1), "VALID",
        dimension_numbers=("NCHW", "OIHW", "NCHW"))
    conv = conv + params["bc"][None, :, None, None]
    flat = conv.reshape(conv.shape[0], -1)               # (B, 36), CHW order
    h1 = jax.nn.relu(flat @ params["w1"].T + params["b1"])
    h2 = jax.nn.relu(h1 @ params["w2"].T + params["b2"])
    return h2 @ params["wq"].T + params["bq"]


if __name__ == "__main__":
    key = jax.random.PRNGKey(0)
    kp, ks, ka = jax.random.split(key, 3)
    params = init_params(kp)

    B = 8
    state = jax.random.normal(ks, (B, IN_H, IN_W, IN_C), jnp.float32)
    action = jax.random.normal(ka, (B, 5), jnp.float32)  # unused by forward (as in reference)
    q_ref = reference_forward(state, action, params)

    # --- f32 path, single block (tight tolerance) ---
    prepped = preprocess_params(params)                   # one-time weight fold
    q = jax.block_until_ready(jax.jit(critic_forward)(state, action, prepped))
    np.testing.assert_allclose(np.asarray(q), np.asarray(q_ref), rtol=1e-4, atol=1e-5)

    # --- ragged multi-step grid (batch NOT a multiple of the tile), no padding ---
    B2 = 200
    state2 = jax.random.normal(jax.random.PRNGKey(1), (B2, IN_H, IN_W, IN_C), jnp.float32)
    ragged_fwd = jax.jit(
        lambda s, a, p: critic_forward(s, a, p, max_tile_b=128, min_split_b=0))
    q2 = jax.block_until_ready(ragged_fwd(state2, action, prepped))
    q2_ref = reference_forward(state2, action, params)
    np.testing.assert_allclose(np.asarray(q2), np.asarray(q2_ref), rtol=1e-4, atol=1e-5)

    # --- bf16 streaming path (halved HBM traffic; looser tolerance) ---
    prepped_bf16 = preprocess_params(params, dtype=jnp.bfloat16)
    q3 = jax.block_until_ready(jax.jit(critic_forward)(state, action, prepped_bf16))
    np.testing.assert_allclose(np.asarray(q3), np.asarray(q_ref), rtol=5e-2, atol=5e-2)

    print("KERNEL_OK")
</pallas_src>

<mosaic_0001>
module attributes {stable_mosaic.version = 11 : i64} {
  func.func @critic_kernel(%arg0: i32, %arg1: memref<8x200xf32, #tpu.memory_space<vmem>>, %arg2: memref<200x32xf32, #tpu.memory_space<vmem>>, %arg3: memref<32x64xf32, #tpu.memory_space<vmem>>, %arg4: memref<4x128xf32, #tpu.memory_space<vmem>>, %arg5: memref<1x8xf32, #tpu.memory_space<vmem>>) attributes {dimension_semantics = [#tpu.dimension_semantics<parallel>], iteration_bounds = array<i64: 1>, scalar_prefetch = 0 : i64, scratch_operands = 0 : i64, tpu.core_type = #tpu.core_type<tc>, window_params = [{transform_indices = @transform_0, window_bounds = array<i64: 8, 200>}, {pipeline_mode = #tpu.pipeline_mode<synchronous>, transform_indices = @transform_1, window_bounds = array<i64: 200, 32>}, {pipeline_mode = #tpu.pipeline_mode<synchronous>, transform_indices = @transform_2, window_bounds = array<i64: 32, 64>}, {pipeline_mode = #tpu.pipeline_mode<synchronous>, transform_indices = @transform_3, window_bounds = array<i64: 4, 128>}, {transform_indices = @transform_4, window_bounds = array<i64: 1, 8>}]} {
    %c0 = arith.constant 0 : index
    %c0_0 = arith.constant 0 : index
    %0 = vector.load %arg4[%c0, %c0_0] : memref<4x128xf32, #tpu.memory_space<vmem>>, vector<1x32xf32>
    %c1 = arith.constant 1 : index
    %c0_1 = arith.constant 0 : index
    %1 = vector.load %arg4[%c1, %c0_1] : memref<4x128xf32, #tpu.memory_space<vmem>>, vector<1x64xf32>
    %c2 = arith.constant 2 : index
    %c0_2 = arith.constant 0 : index
    %2 = vector.load %arg4[%c2, %c0_2] : memref<4x128xf32, #tpu.memory_space<vmem>>, vector<1x64xf32>
    %c3 = arith.constant 3 : index
    %c0_3 = arith.constant 0 : index
    %3 = vector.load %arg4[%c3, %c0_3] : memref<4x128xf32, #tpu.memory_space<vmem>>, vector<1x1xf32>
    %c0_4 = arith.constant 0 : index
    %c0_5 = arith.constant 0 : index
    %4 = vector.load %arg1[%c0_4, %c0_5] : memref<8x200xf32, #tpu.memory_space<vmem>>, vector<8x200xf32>
    %c0_6 = arith.constant 0 : index
    %c0_7 = arith.constant 0 : index
    %5 = vector.load %arg2[%c0_6, %c0_7] : memref<200x32xf32, #tpu.memory_space<vmem>>, vector<200x32xf32>
    %cst = arith.constant dense<0.000000e+00> : vector<8x32xf32>
    %6 = tpu.matmul %4, %5, %cst {dimension_numbers = #tpu.dot_dimension_numbers<[1], [0], [0], [1], [0, 0, 1, 1], [], []>} : vector<8x200xf32>, vector<200x32xf32>, vector<8x32xf32> -> vector<8x32xf32>
    %7 = vector.broadcast %0 : vector<1x32xf32> to vector<8x32xf32>
    %8 = arith.addf %6, %7 : vector<8x32xf32>
    %cst_8 = arith.constant 0.000000e+00 : f32
    %9 = vector.broadcast %cst_8 : f32 to vector<8x32xf32>
    %10 = arith.maximumf %8, %9 : vector<8x32xf32>
    %c0_9 = arith.constant 0 : index
    %c0_10 = arith.constant 0 : index
    %11 = vector.load %arg3[%c0_9, %c0_10] : memref<32x64xf32, #tpu.memory_space<vmem>>, vector<32x64xf32>
    %cst_11 = arith.constant dense<0.000000e+00> : vector<8x64xf32>
    %12 = tpu.matmul %10, %11, %cst_11 {dimension_numbers = #tpu.dot_dimension_numbers<[1], [0], [0], [1], [0, 0, 1, 1], [], []>} : vector<8x32xf32>, vector<32x64xf32>, vector<8x64xf32> -> vector<8x64xf32>
    %13 = vector.broadcast %1 : vector<1x64xf32> to vector<8x64xf32>
    %14 = arith.addf %12, %13 : vector<8x64xf32>
    %cst_12 = arith.constant 0.000000e+00 : f32
    %15 = vector.broadcast %cst_12 : f32 to vector<8x64xf32>
    %16 = arith.maximumf %14, %15 : vector<8x64xf32>
    %cst_13 = arith.constant dense<0.000000e+00> : vector<1x8xf32>
    %17 = tpu.matmul %2, %16, %cst_13 {dimension_numbers = #tpu.dot_dimension_numbers<[1], [1], [0], [0], [0, 0, 1, 0], [], []>} : vector<1x64xf32>, vector<8x64xf32>, vector<1x8xf32> -> vector<1x8xf32>
    %18 = vector.broadcast %3 : vector<1x1xf32> to vector<1x8xf32>
    %19 = arith.addf %17, %18 : vector<1x8xf32>
    %c0_14 = arith.constant 0 : index
    %c0_15 = arith.constant 0 : index
    %20 = vector.load %arg5[%c0_14, %c0_15] : memref<1x8xf32, #tpu.memory_space<vmem>>, vector<1x8xf32>
    tpu.vector_store %arg5[%c0_14, %c0_15], %19 {strides = array<i32>} : memref<1x8xf32, #tpu.memory_space<vmem>>, vector<1x8xf32>,
    return
  }
  func.func @transform_0(%arg0: i32) -> (i32, i32) {
    %c0_i32 = arith.constant 0 : i32
    %c0_i32_0 = arith.constant 0 : i32
    return %arg0, %c0_i32 : i32, i32
  }
  func.func @transform_1(%arg0: i32) -> (i32, i32) {
    %c0_i32 = arith.constant 0 : i32
    %c0_i32_0 = arith.constant 0 : i32
    %c0_i32_1 = arith.constant 0 : i32
    return %c0_i32, %c0_i32_0 : i32, i32
  }
  func.func @transform_2(%arg0: i32) -> (i32, i32) {
    %c0_i32 = arith.constant 0 : i32
    %c0_i32_0 = arith.constant 0 : i32
    %c0_i32_1 = arith.constant 0 : i32
    return %c0_i32, %c0_i32_0 : i32, i32
  }
  func.func @transform_3(%arg0: i32) -> (i32, i32) {
    %c0_i32 = arith.constant 0 : i32
    %c0_i32_0 = arith.constant 0 : i32
    %c0_i32_1 = arith.constant 0 : i32
    return %c0_i32, %c0_i32_0 : i32, i32
  }
  func.func @transform_4(%arg0: i32) -> (i32, i32) {
    %c0_i32 = arith.constant 0 : i32
    %c0_i32_0 = arith.constant 0 : i32
    return %c0_i32, %arg0 : i32, i32
  }
}

</mosaic_0001>

<llo_original>
// kernel: critic_forward.1
$region0: #{critic_forward.1}
  #allocation0 [shape = 'u32[]', space=smem, size = 0x4, offset = 0x4, fixed_abs, tag = 'smem constant byte address 0x4 - core index']
  #allocation1 [shape = 'u32[144,128]{1,0:T(1,128)}', space=vmem, size = 0x12000, scoped, tag = 'internal scratch']
  %s0 = inlined_call_operand.vmem [shape: f32[8,200], index: 0, kind: input, shape index: {}]
  %s1 = inlined_call_operand.vmem [shape: f32[200,32], index: 1, kind: input, shape index: {}]
  %s2 = inlined_call_operand.vmem [shape: f32[32,64], index: 2, kind: input, shape index: {}]
  %s3 = inlined_call_operand.vmem [shape: f32[4,128], index: 3, kind: input, shape index: {}]
  %s4 = inlined_call_operand.hbm [shape: f32[1,8], index: 4, kind: output, shape index: {}]
  %s5 = sld [smem:[#allocation0]]
  $region26: #{critic_forward.1} parent=0
    _
  %s7 = ssub.s32 1, %s5
  %s8 = scalar_select 0, %s7, %s5
  $region1: #{critic_forward.1} parent=0
    #allocation2 [shape = 'u8[512]{0}', space=vmem, size = 0x400, scoped, tag = 'output window, operand 0, single buffered']
    #allocation3 [shape = 's32[1]{0}', space=sflag, size = 0x4, scoped, tag = 'scoped memory for critic_forward.1']
    %9 = vsyncpa [#allocation3], 0
    // Predicated region
    $region2: #{critic_forward.1} parent=1 // pred_check
      _
    $region3: #{critic_forward.1} parent=1 // pred_check_branch
      %11 = sbr.rel (0) target = $region5
    $region4: #{critic_forward.1} parent=1 // pred_region
      _
    $region5: #{critic_forward.1} parent=1 // pred_fallthru
      _
    // Predicated region
    $region6: #{critic_forward.1} parent=1 // pred_check
      _
    $region7: #{critic_forward.1} parent=1 // pred_check_branch
      %13 = sbr.rel (0) target = $region9
    $region8: #{critic_forward.1} parent=1 // pred_region
      _
    $region9: #{critic_forward.1} parent=1 // pred_fallthru
      _
    // Predicated region
    $region10: #{critic_forward.1} parent=1 // pred_check
      _
    $region11: #{critic_forward.1} parent=1 // pred_check_branch
      %15 = sbr.rel (0) target = $region13
    $region12: #{critic_forward.1} parent=1 // pred_region
      _
    $region13: #{critic_forward.1} parent=1 // pred_fallthru
      _
    // Predicated region
    $region14: #{critic_forward.1} parent=1 // pred_check
      _
    $region15: #{critic_forward.1} parent=1 // pred_check_branch
      %17 = sbr.rel (0) target = $region17
    $region16: #{critic_forward.1} parent=1 // pred_region
      _
    $region17: #{critic_forward.1} parent=1 // pred_fallthru
      _
    %v18 = vld [vmem:[%s3] sm:$0x1]
    %v19 = vld [vmem:[%s3 + $0x1] sm:$0x1]
    %v20 = vld [vmem:[%s3 + $0x2] sm:$0x1]
    %v21 = vld [vmem:[%s3 + $0x3] sm:$0x1]
    %v22 = vld [vmem:[%s0] sm:$0xff]
    %v23 = vld [vmem:[%s0 + $0x8] sm:$0xff]
    %v24 = vld [vmem:[%s1] sm:$0xff]
    %v25 = vld [vmem:[%s1 + $0x8] sm:$0xff]
    %v26 = vld [vmem:[%s1 + $0x10] sm:$0xff]
    %v27 = vld [vmem:[%s1 + $0x18] sm:$0xff]
    %v28 = vld [vmem:[%s1 + $0x20] sm:$0xff]
    %v29 = vld [vmem:[%s1 + $0x28] sm:$0xff]
    %v30 = vld [vmem:[%s1 + $0x30] sm:$0xff]
    %v31 = vld [vmem:[%s1 + $0x38] sm:$0xff]
    %v32 = vld [vmem:[%s1 + $0x40] sm:$0xff]
    %v33 = vld [vmem:[%s1 + $0x48] sm:$0xff]
    %v34 = vld [vmem:[%s1 + $0x50] sm:$0xff]
    %v35 = vld [vmem:[%s1 + $0x58] sm:$0xff]
    %v36 = vld [vmem:[%s1 + $0x60] sm:$0xff]
    %v37 = vld [vmem:[%s1 + $0x68] sm:$0xff]
    %v38 = vld [vmem:[%s1 + $0x70] sm:$0xff]
    %v39 = vld [vmem:[%s1 + $0x78] sm:$0xff]
    %v40 = vld [vmem:[%s1 + $0x80] sm:$0xff]
    %v41 = vld [vmem:[%s1 + $0x88] sm:$0xff]
    %v42 = vld [vmem:[%s1 + $0x90] sm:$0xff]
    %v43 = vld [vmem:[%s1 + $0x98] sm:$0xff]
    %v44 = vld [vmem:[%s1 + $0xa0] sm:$0xff]
    %v45 = vld [vmem:[%s1 + $0xa8] sm:$0xff]
    %v46 = vld [vmem:[%s1 + $0xb0] sm:$0xff]
    %v47 = vld [vmem:[%s1 + $0xb8] sm:$0xff]
    %v48 = vld [vmem:[%s1 + $0xc0] sm:$0xff]
    %v49 = vlaneseq
    %v50 = vshrl.u32 %v49, 7
    %v51 = vsub.s32 0, %v50
    %v52 = vrot.slane %v18, %v51
    %vm53 = vcmask 588800
    %v55 = vsel %vm53, %v23, 0
    %57 = vmatprep.subr.mxu0 0.0
    %58 = vmatpush1.msra.mxu0 %v24
    %59 = vmatprep.subr.mxu0 0.0
    %60 = vmatpush1.msra.mxu0 %v25
    %61 = vmatprep.subr.mxu0 0.0
    %62 = vmatpush1.msra.mxu0 %v26
    %63 = vmatprep.subr.mxu0 0.0
    %64 = vmatpush1.msra.mxu0 %v27
    %65 = vmatprep.subr.mxu0 0.0
    %66 = vmatpush1.msra.mxu0 %v28
    %67 = vmatprep.subr.mxu0 0.0
    %68 = vmatpush1.msra.mxu0 %v29
    %69 = vmatprep.subr.mxu0 0.0
    %70 = vmatpush1.msra.mxu0 %v30
    %71 = vmatprep.subr.mxu0 0.0
    %72 = vmatpush1.msra.mxu0 %v31
    %73 = vmatprep.subr.mxu0 0.0
    %74 = vmatpush1.msra.mxu0 %v32
    %75 = vmatprep.subr.mxu0 0.0
    %76 = vmatpush1.msra.mxu0 %v33
    %77 = vmatprep.subr.mxu0 0.0
    %78 = vmatpush1.msra.mxu0 %v34
    %79 = vmatprep.subr.mxu0 0.0
    %80 = vmatpush1.msra.mxu0 %v35
    %81 = vmatprep.subr.mxu0 0.0
    %82 = vmatpush1.msra.mxu0 %v36
    %83 = vmatprep.subr.mxu0 0.0
    %84 = vmatpush1.msra.mxu0 %v37
    %85 = vmatprep.subr.mxu0 0.0
    %86 = vmatpush1.msra.mxu0 %v38
    %87 = vmatprep.subr.mxu0 0.0
    %88 = vmatpush1.msra.mxu0 %v39
    %89 = vmatprep.subr.mxu0 0.0
    %90 = vmatpush1.msra.mxu0 %v40
    %91 = vmatprep.subr.mxu0 0.0
    %92 = vmatpush1.msra.mxu0 %v41
    %93 = vmatprep.subr.mxu0 0.0
    %94 = vmatpush1.msra.mxu0 %v42
    %95 = vmatprep.subr.mxu0 0.0
    %96 = vmatpush1.msra.mxu0 %v43
    %97 = vmatprep.subr.mxu0 0.0
    %98 = vmatpush1.msra.mxu0 %v44
    %99 = vmatprep.subr.mxu0 0.0
    %100 = vmatpush1.msra.mxu0 %v45
    %101 = vmatprep.subr.mxu0 0.0
    %102 = vmatpush1.msra.mxu0 %v46
    %103 = vmatprep.subr.mxu0 0.0
    %104 = vmatpush1.msra.mxu0 %v47
    %105 = vmatprep.subr.mxu0 0.0
    %106 = vmatpush1.msra.mxu0 %v48
    %107 = vmatprep.subr.mxu0 0.0
    %108 = vmatpush1.msra.mxu0 0.0
    %109 = vmatprep.subr.mxu0 0.0
    %110 = vmatpush1.msra.mxu0 0.0
    %111 = vmatprep.subr.mxu0 0.0
    %112 = vmatpush1.msra.mxu0 0.0
    %113 = vmatprep.subr.mxu0 0.0
    %114 = vmatpush1.msra.mxu0 0.0
    %115 = vmatprep.subr.mxu0 0.0
    %116 = vmatpush1.msra.mxu0 0.0
    %117 = vmatprep.subr.mxu0 0.0
    %118 = vmatpush1.msra.mxu0 0.0
    %119 = vmatprep.subr.mxu0 0.0
    %120 = vmatpush1.msra.mxu0 0.0
    %121 = vmatprep.mubr.f32.mxu0 %v55
    %122 = vmatmul.mubr.f32.gmra.mrb[0].mxu0 %v22
    %v123 = vpop.f32.mrb[0].mxu0
    %v124 = vadd.f32 %v52, %v123
    %v125 = vpop.f32.mrb[0].mxu0
    %126 = vdwg.mxu0
    %v127 = vmax.f32 %v124, 0.0
    %v128 = vld [vmem:[%s2] sm:$0xff]
    %v129 = vld [vmem:[%s2 + $0x8] sm:$0xff]
    %v130 = vld [vmem:[%s2 + $0x10] sm:$0xff]
    %v131 = vld [vmem:[%s2 + $0x18] sm:$0xff]
    %v132 = vlaneseq
    %v133 = vshrl.u32 %v132, 7
    %v134 = vsub.s32 0, %v133
    %v135 = vrot.slane %v19, %v134
    %vm136 = vcmask 261120
    %v138 = vsel %vm136, %v127, 0
    %140 = vmatprep.subr.mxu0 0.0
    %141 = vmatpush1.msra.mxu0 %v128
    %142 = vmatprep.subr.mxu0 0.0
    %143 = vmatpush1.msra.mxu0 %v129
    %144 = vmatprep.subr.mxu0 0.0
    %145 = vmatpush1.msra.mxu0 %v130
    %146 = vmatprep.subr.mxu0 0.0
    %147 = vmatpush1.msra.mxu0 %v131
    %148 = vmatprep.subr.mxu0 0.0
    %149 = vmatpush1.msra.mxu0 0.0
    %150 = vmatprep.subr.mxu0 0.0
    %151 = vmatpush1.msra.mxu0 0.0
    %152 = vmatprep.subr.mxu0 0.0
    %153 = vmatpush1.msra.mxu0 0.0
    %154 = vmatprep.subr.mxu0 0.0
    %155 = vmatpush1.msra.mxu0 0.0
    %156 = vmatprep.subr.mxu0 0.0
    %157 = vmatpush1.msra.mxu0 0.0
    %158 = vmatprep.subr.mxu0 0.0
    %159 = vmatpush1.msra.mxu0 0.0
    %160 = vmatprep.subr.mxu0 0.0
    %161 = vmatpush1.msra.mxu0 0.0
    %162 = vmatprep.subr.mxu0 0.0
    %163 = vmatpush1.msra.mxu0 0.0
    %164 = vmatprep.subr.mxu0 0.0
    %165 = vmatpush1.msra.mxu0 0.0
    %166 = vmatprep.subr.mxu0 0.0
    %167 = vmatpush1.msra.mxu0 0.0
    %168 = vmatprep.subr.mxu0 0.0
    %169 = vmatpush1.msra.mxu0 0.0
    %170 = vmatprep.subr.mxu0 0.0
    %171 = vmatpush1.msra.mxu0 0.0
    %172 = vmatprep.subr.mxu0 0.0
    %173 = vmatpush1.msra.mxu0 0.0
    %174 = vmatprep.subr.mxu0 0.0
    %175 = vmatpush1.msra.mxu0 0.0
    %176 = vmatprep.subr.mxu0 0.0
    %177 = vmatpush1.msra.mxu0 0.0
    %178 = vmatprep.subr.mxu0 0.0
    %179 = vmatpush1.msra.mxu0 0.0
    %180 = vmatprep.subr.mxu0 0.0
    %181 = vmatpush1.msra.mxu0 0.0
    %182 = vmatprep.subr.mxu0 0.0
    %183 = vmatpush1.msra.mxu0 0.0
    %184 = vmatprep.subr.mxu0 0.0
    %185 = vmatpush1.msra.mxu0 0.0
    %186 = vmatprep.subr.mxu0 0.0
    %187 = vmatpush1.msra.mxu0 0.0
    %188 = vmatprep.subr.mxu0 0.0
    %189 = vmatpush1.msra.mxu0 0.0
    %190 = vmatprep.subr.mxu0 0.0
    %191 = vmatpush1.msra.mxu0 0.0
    %192 = vmatprep.subr.mxu0 0.0
    %193 = vmatpush1.msra.mxu0 0.0
    %194 = vmatprep.subr.mxu0 0.0
    %195 = vmatpush1.msra.mxu0 0.0
    %196 = vmatprep.subr.mxu0 0.0
    %197 = vmatpush1.msra.mxu0 0.0
    %198 = vmatprep.subr.mxu0 0.0
    %199 = vmatpush1.msra.mxu0 0.0
    %200 = vmatprep.subr.mxu0 0.0
    %201 = vmatpush1.msra.mxu0 0.0
    %202 = vmatprep.subr.mxu0 0.0
    %203 = vmatpush1.msra.mxu0 0.0
    %204 = vmatprep.mubr.f32.mxu0 0.0
    %205 = vmatmul.mubr.f32.gmra.mrb[0].mxu0 %v138
    %v206 = vpop.f32.mrb[0].mxu0
    %v207 = vadd.f32 %v135, %v206
    %v208 = vpop.f32.mrb[0].mxu0
    %209 = vdwg.mxu0
    %v210 = vmax.f32 %v207, 0.0
    %212 = vset.pattern.permute.xlu0 0
    %213 = vperm.xlu0 %212, %v21
    %v214 = vpop.permute.xlu0 %213
    %vm216 = vcmask 523264
    %v218 = vsel %vm216, %v20, 0
    %v221 = vsel %vm216, %v210, 0
    %223 = vmatprep.subr.mxu0 0.0
    %224 = vmatpush1.xpose.msra.mxu0 %v221
    %225 = vmatprep.subr.mxu0 0.0
    %226 = vmatpush1.xpose.msra.mxu0 0.0
    %227 = vmatprep.subr.mxu0 0.0
    %228 = vmatpush1.xpose.msra.mxu0 0.0
    %229 = vmatprep.subr.mxu0 0.0
    %230 = vmatpush1.xpose.msra.mxu0 0.0
    %231 = vmatprep.subr.mxu0 0.0
    %232 = vmatpush1.xpose.msra.mxu0 0.0
    %233 = vmatprep.subr.mxu0 0.0
    %234 = vmatpush1.xpose.msra.mxu0 0.0
    %235 = vmatprep.subr.mxu0 0.0
    %236 = vmatpush1.xpose.msra.mxu0 0.0
    %237 = vmatprep.subr.mxu0 0.0
    %238 = vmatpush1.xpose.msra.mxu0 0.0
    %239 = vmatprep.subr.mxu0 0.0
    %240 = vmatpush1.xpose.msra.mxu0 0.0
    %241 = vmatprep.subr.mxu0 0.0
    %242 = vmatpush1.xpose.msra.mxu0 0.0
    %243 = vmatprep.subr.mxu0 0.0
    %244 = vmatpush1.xpose.msra.mxu0 0.0
    %245 = vmatprep.subr.mxu0 0.0
    %246 = vmatpush1.xpose.msra.mxu0 0.0
    %247 = vmatprep.subr.mxu0 0.0
    %248 = vmatpush1.xpose.msra.mxu0 0.0
    %249 = vmatprep.subr.mxu0 0.0
    %250 = vmatpush1.xpose.msra.mxu0 0.0
    %251 = vmatprep.subr.mxu0 0.0
    %252 = vmatpush1.xpose.msra.mxu0 0.0
    %253 = vmatprep.subr.mxu0 0.0
    %254 = vmatpush1.xpose.msra.mxu0 0.0
    %255 = vmatprep.subr.mxu0 0.0
    %256 = vmatpush1.xpose.msra.mxu0 0.0
    %257 = vmatprep.subr.mxu0 0.0
    %258 = vmatpush1.xpose.msra.mxu0 0.0
    %259 = vmatprep.subr.mxu0 0.0
    %260 = vmatpush1.xpose.msra.mxu0 0.0
    %261 = vmatprep.subr.mxu0 0.0
    %262 = vmatpush1.xpose.msra.mxu0 0.0
    %263 = vmatprep.subr.mxu0 0.0
    %264 = vmatpush1.xpose.msra.mxu0 0.0
    %265 = vmatprep.subr.mxu0 0.0
    %266 = vmatpush1.xpose.msra.mxu0 0.0
    %267 = vmatprep.subr.mxu0 0.0
    %268 = vmatpush1.xpose.msra.mxu0 0.0
    %269 = vmatprep.subr.mxu0 0.0
    %270 = vmatpush1.xpose.msra.mxu0 0.0
    %271 = vmatprep.subr.mxu0 0.0
    %272 = vmatpush1.xpose.msra.mxu0 0.0
    %273 = vmatprep.subr.mxu0 0.0
    %274 = vmatpush1.xpose.msra.mxu0 0.0
    %275 = vmatprep.subr.mxu0 0.0
    %276 = vmatpush1.xpose.msra.mxu0 0.0
    %277 = vmatprep.subr.mxu0 0.0
    %278 = vmatpush1.xpose.msra.mxu0 0.0
    %279 = vmatprep.subr.mxu0 0.0
    %280 = vmatpush1.xpose.msra.mxu0 0.0
    %281 = vmatprep.subr.mxu0 0.0
    %282 = vmatpush1.xpose.msra.mxu0 0.0
    %283 = vmatprep.subr.mxu0 0.0
    %284 = vmatpush1.xpose.msra.mxu0 0.0
    %285 = vmatprep.subr.mxu0 0.0
    %286 = vmatpush1.xpose.msra.mxu0 0.0
    %287 = vmatprep.mubr.f32.mxu0 0.0
    %288 = vmatmul.mubr.f32.gmra.mrb[0].mxu0 %v218
    %v289 = vpop.f32.mrb[0].mxu0
    %v290 = vadd.f32 %v214, %v289
    %v291 = vpop.f32.mrb[0].mxu0
    %292 = vdwg.mxu0
    %vm293 = vcmask 57344
    %294 = vst.msk [vmem:[#allocation2] sm:$0x1] %vm293, %v290
    // Predicated region
    $region18: #{critic_forward.1} parent=1 // pred_check
      _
    $region19: #{critic_forward.1} parent=1 // pred_check_branch
      %296 = sbr.rel (0) target = $region21
    $region20: #{critic_forward.1} parent=1 // pred_region
      %s298 = ssub.s32 16, 16
      %299 = vsyncadd [#allocation3], %s298
      %s301 = sshll.u32 [#allocation2], 4
      %s302 = int_to_ptr.vmem [resolvable:$true] %s301
      %304 = dma.vmem_to_hbm [thread:$0]  %s302, 16, %s4, [#allocation3]
    $region21: #{critic_forward.1} parent=1 // pred_fallthru
      _
    // Predicated region
    $region22: #{critic_forward.1} parent=1 // pred_check
      _
    $region23: #{critic_forward.1} parent=1 // pred_check_branch
      %306 = sbr.rel (0) target = $region25
    $region24: #{critic_forward.1} parent=1 // pred_region
      %307 = dma.done [#allocation3], 16
    $region25: #{critic_forward.1} parent=1 // pred_fallthru
      _
    %308 = vsyncpa [#allocation3], 1

</llo_original>
